<compile_context>
chip_gen: v5e
topology: v5e:2x2
jax: 0.10.0
libtpu: 0.0.40
codegen_flags: <defaults>
</compile_context>

<pallas_src>
import functools

import jax
import jax.numpy as jnp
from jax.experimental import pallas as pl
from jax.experimental.pallas import tpu as pltpu

LEAKY_SLOPE = 0.01  # nn.LeakyReLU() default


def _round_up(v, m):
    return (v + m - 1) // m * m


def _temporal_block_kernel(xb_ref, xh_ref, w1_ref, b1_ref, w2_ref, b2_ref,
                           wd_ref, bd_ref, a_ref, o_ref,
                           *, K, dilation, pad, L, TL, has_downsample):
    j = pl.program_id(1)
    halo = 4 * pad                       # extra input columns needed past the tile
    W_h = TL + 2 * pad                   # width of the h1 (conv1 output) window

    # Input window (C_in, TL + 4*pad), native dtype: current body block plus the
    # left strip of the next block (the halo).  No upcast — MXU accumulates in f32.
    if halo > 0:
        xwin = jnp.concatenate([xb_ref[0], xh_ref[0, :, :halo]], axis=-1)
    else:
        xwin = xb_ref[0]

    def im2col(v, width):
        # (C, *) -> (K*C, width): row block k is v shifted left by k*dilation.
        if K == 1:
            return v[:, :width]
        return jnp.concatenate(
            [v[:, k * dilation:k * dilation + width] for k in range(K)], axis=0)

    # ---- conv1 (dilated, weight-normed) as ONE fused tap matmul ----
    h1 = jnp.dot(w1_ref[...], im2col(xwin, W_h),
                 preferred_element_type=jnp.float32) + b1_ref[...]
    h1 = jnp.where(h1 >= 0, h1, LEAKY_SLOPE * h1)            # LeakyReLU
    # TODO(synk): dropout1/dropout2 are identity in eval mode; training-mode
    # dropout (random masking) is not implemented here.

    # Zero h1 columns whose global position lies outside [0, L): this implements
    # conv2's zero padding and kills garbage in out-of-range halo / tail columns.
    g = jax.lax.broadcasted_iota(jnp.int32, (1, W_h), 1) + (j * TL - pad)
    h1 = jnp.where(jnp.logical_and(g >= 0, g < L), h1, 0.0)
    h1 = h1.astype(w2_ref.dtype)

    # ---- conv2, same fused tap matmul over the h1 window ----
    h2 = jnp.dot(w2_ref[...], im2col(h1, TL),
                 preferred_element_type=jnp.float32) + b2_ref[...]
    h2 = jnp.where(h2 >= 0, h2, LEAKY_SLOPE * h2)            # LeakyReLU

    # ---- residual path ----
    x_res = xwin[:, 2 * pad:2 * pad + TL]                    # un-padded input slice
    if has_downsample:
        res = jnp.dot(wd_ref[...], x_res,
                      preferred_element_type=jnp.float32) + bd_ref[...]
    else:
        res = x_res.astype(jnp.float32)

    s = h2 + res
    a = a_ref[0]                                             # PReLU slope (SMEM scalar)
    o_ref[0] = jnp.where(s >= 0, s, a * s).astype(o_ref.dtype)


def temporal_block(x, w1, b1, w2, b2, wd, bd, prelu_a,
                   *, kernel_size, stride, dilation, padding, tile_l=512):
    """Pallas TemporalBlock forward.  x: (N, C_in, L)."""
    assert stride == 1, "residual add requires stride == 1 (as in the reference module)"
    N, C_in, L = x.shape
    C_out = w1.shape[0]
    K = kernel_size
    L_out = (L + 2 * padding - dilation * (K - 1) - 1) // stride + 1
    assert L_out == L, "out + res only works when conv output length == input length"

    pad = padding
    # Halo block width (lane aligned) and L tile (multiple of the halo width so the
    # halo block's start, (j+1)*TL, is expressible as a block index).
    Hb = max(128, _round_up(4 * pad, 128))
    TL = max(128, min(_round_up(tile_l, 128), _round_up(L, 128)))
    TL = _round_up(TL, Hb)
    n_tiles = -(-L // TL)
    L_big = n_tiles * TL + Hb

    # TODO(synk): the zero-pad is still a wrapper-side pass over x; it could be
    # folded into the kernel with boundary masking to save one HBM round trip.
    x_big = jnp.pad(x, ((0, 0), (0, 0), (2 * pad, L_big - L - 2 * pad)))

    has_downsample = wd is not None
    if not has_downsample:
        assert C_in == C_out
        wd = jnp.zeros((C_out, C_in, 1), x.dtype)
        bd = jnp.zeros((C_out,), x.dtype)

    # Fused tap-major weights: row = output channel, col = (tap k, input channel c).
    # Weights keep their input dtype (pass bf16 to feed the bf16 MXU directly).
    w1f = jnp.transpose(w1, (0, 2, 1)).reshape(C_out, K * C_in)
    w2f = jnp.transpose(w2, (0, 2, 1)).reshape(C_out, K * C_out)
    wdf = wd[:, :, 0]
    b1_2d = b1.reshape(C_out, 1).astype(jnp.float32)
    b2_2d = b2.reshape(C_out, 1).astype(jnp.float32)
    bd_2d = bd.reshape(C_out, 1).astype(jnp.float32)
    a_1d = jnp.asarray(prelu_a, jnp.float32).reshape(1)

    kernel = functools.partial(
        _temporal_block_kernel, K=K, dilation=dilation, pad=pad, L=L, TL=TL,
        has_downsample=has_downsample)

    def full_spec(shape):
        return pl.BlockSpec(shape, lambda b, j: (0,) * len(shape))

    halo_step = TL // Hb  # halo block index stride (in Hb-sized blocks)

    out = pl.pallas_call(
        kernel,
        out_shape=jax.ShapeDtypeStruct((N, C_out, n_tiles * TL), x.dtype),
        grid_spec=pltpu.PrefetchScalarGridSpec(
            num_scalar_prefetch=0,
            grid=(N, n_tiles),
            in_specs=[
                # body tile of the padded input
                pl.BlockSpec((1, C_in, TL), lambda b, j: (b, 0, j)),
                # right halo: first Hb columns of the next body tile
                pl.BlockSpec((1, C_in, Hb), lambda b, j: (b, 0, (j + 1) * halo_step)),
                full_spec((C_out, K * C_in)),    # w1 fused
                full_spec((C_out, 1)),           # b1
                full_spec((C_out, K * C_out)),   # w2 fused
                full_spec((C_out, 1)),           # b2
                full_spec((C_out, C_in)),        # downsample weight (1x1)
                full_spec((C_out, 1)),           # downsample bias
                pl.BlockSpec(memory_space=pltpu.MemorySpace.SMEM),   # PReLU slope
            ],
            out_specs=pl.BlockSpec((1, C_out, TL), lambda b, j: (b, 0, j)),
        ),
        compiler_params=pltpu.CompilerParams(
            dimension_semantics=("parallel", "parallel"),
            vmem_limit_bytes=32 * 1024 * 1024),
    )(x_big, x_big, w1f, b1_2d, w2f, b2_2d, wdf, bd_2d, a_1d)

    return out[:, :, :L] if n_tiles * TL != L else out


def reference(x, w1, b1, w2, b2, wd, bd, a, *, dilation, padding):
    """Pure-JAX reference matching PyTorch semantics (eval mode)."""
    def conv1d(inp, w, b, pad, dil):
        y = jax.lax.conv_general_dilated(
            inp, w, window_strides=(1,), padding=[(pad, pad)],
            rhs_dilation=(dil,), dimension_numbers=('NCH', 'OIH', 'NCH'))
        return y + b[None, :, None]

    def leaky(v):
        return jnp.where(v >= 0, v, LEAKY_SLOPE * v)

    h = leaky(conv1d(x, w1, b1, padding, dilation))
    h = leaky(conv1d(h, w2, b2, padding, dilation))
    res = x if wd is None else conv1d(x, wd, bd, 0, 1)
    s = h + res
    return jnp.where(s >= 0, s, a * s)


if __name__ == "__main__":
    key = jax.random.PRNGKey(0)

    # weight_norm reparam: w = g * v / ||v|| with g initialized to ||v|| -> w == v,
    # where v ~ N(0, 0.01) as in init_weights().
    def weight_normed(kk, shape):
        v = 0.01 * jax.random.normal(kk, shape, jnp.float32)
        norm = jnp.sqrt(jnp.sum(v * v, axis=(1, 2), keepdims=True))
        return norm * v / norm

    def run_case(k, N, C_in, C_out, L, K, dilation, padding, tile_l):
        k1, k2, k3, k4, k5, k6, kx = jax.random.split(k, 7)
        w1 = weight_normed(k1, (C_out, C_in, K))
        w2 = weight_normed(k2, (C_out, C_out, K))
        if C_in != C_out:
            wd = 0.01 * jax.random.normal(k3, (C_out, C_in, 1), jnp.float32)
            bd = 0.05 * jax.random.normal(k6, (C_out,), jnp.float32)
        else:
            wd, bd = None, None
        b1 = 0.05 * jax.random.normal(k4, (C_out,), jnp.float32)
        b2 = 0.05 * jax.random.normal(k5, (C_out,), jnp.float32)
        prelu_a = 0.5                                   # nn.PReLU(init=0.5)
        x = jax.random.normal(kx, (N, C_in, L), jnp.float32)

        out = temporal_block(x, w1, b1, w2, b2, wd, bd, prelu_a,
                             kernel_size=K, stride=1, dilation=dilation,
                             padding=padding, tile_l=tile_l)
        out = jax.block_until_ready(out)
        ref = reference(x, w1, b1, w2, b2, wd, bd, prelu_a,
                        dilation=dilation, padding=padding)
        assert out.shape == (N, C_out, L)
        assert jnp.allclose(out, ref, atol=1e-5, rtol=1e-4), "mismatch vs JAX reference"

    k_a, k_b = jax.random.split(key)
    # case 1: downsample residual (C_in != C_out), single L tile
    run_case(k_a, N=2, C_in=4, C_out=8, L=16, K=3, dilation=2, padding=2, tile_l=512)
    # case 2: identity residual (C_in == C_out), multiple L tiles exercising the halo
    run_case(k_b, N=2, C_in=8, C_out=8, L=300, K=3, dilation=4, padding=4, tile_l=128)

    print("KERNEL_OK")
</pallas_src>

<mosaic_0001>
module attributes {stable_mosaic.version = 11 : i64} {
  func.func @_temporal_block_kernel(%arg0: i32, %arg1: i32, %arg2: memref<1x4x128xf32, #tpu.memory_space<vmem>>, %arg3: memref<1x4x128xf32, #tpu.memory_space<vmem>>, %arg4: memref<8x12xf32, #tpu.memory_space<vmem>>, %arg5: memref<8x1xf32, #tpu.memory_space<vmem>>, %arg6: memref<8x24xf32, #tpu.memory_space<vmem>>, %arg7: memref<8x1xf32, #tpu.memory_space<vmem>>, %arg8: memref<8x4xf32, #tpu.memory_space<vmem>>, %arg9: memref<8x1xf32, #tpu.memory_space<vmem>>, %arg10: memref<1xf32, #tpu.memory_space<smem>>, %arg11: memref<1x8x128xf32, #tpu.memory_space<vmem>>) attributes {dimension_semantics = [#tpu.dimension_semantics<parallel>, #tpu.dimension_semantics<parallel>], iteration_bounds = array<i64: 2, 1>, scalar_prefetch = 0 : i64, scratch_operands = 0 : i64, tpu.core_type = #tpu.core_type<tc>, window_params = [{transform_indices = @transform_0, window_bounds = array<i64: 1, 4, 128>}, {transform_indices = @transform_1, window_bounds = array<i64: 1, 4, 128>}, {pipeline_mode = #tpu.pipeline_mode<synchronous>, transform_indices = @transform_2, window_bounds = array<i64: 8, 12>}, {pipeline_mode = #tpu.pipeline_mode<synchronous>, transform_indices = @transform_3, window_bounds = array<i64: 8, 1>}, {pipeline_mode = #tpu.pipeline_mode<synchronous>, transform_indices = @transform_4, window_bounds = array<i64: 8, 24>}, {pipeline_mode = #tpu.pipeline_mode<synchronous>, transform_indices = @transform_5, window_bounds = array<i64: 8, 1>}, {pipeline_mode = #tpu.pipeline_mode<synchronous>, transform_indices = @transform_6, window_bounds = array<i64: 8, 4>}, {pipeline_mode = #tpu.pipeline_mode<synchronous>, transform_indices = @transform_7, window_bounds = array<i64: 8, 1>}, {transform_indices = @transform_8, window_bounds = array<i64: 1>}, {transform_indices = @transform_9, window_bounds = array<i64: 1, 8, 128>}]} {
    %c0 = arith.constant 0 : index
    %c0_0 = arith.constant 0 : index
    %c0_1 = arith.constant 0 : index
    %0 = vector.load %arg2[%c0, %c0_0, %c0_1] : memref<1x4x128xf32, #tpu.memory_space<vmem>>, vector<1x4x128xf32>
    %1 = vector.shape_cast %0 : vector<1x4x128xf32> to vector<4x128xf32>
    %c0_2 = arith.constant 0 : index
    %c0_3 = arith.constant 0 : index
    %c0_4 = arith.constant 0 : index
    %2 = vector.load %arg3[%c0_2, %c0_3, %c0_4] : memref<1x4x128xf32, #tpu.memory_space<vmem>>, vector<1x4x8xf32>
    %3 = vector.shape_cast %2 : vector<1x4x8xf32> to vector<4x8xf32>
    %4 = tpu.concatenate %1, %3 in 1 : vector<4x128xf32>, vector<4x8xf32> -> vector<4x136xf32>
    %c0_5 = arith.constant 0 : index
    %c0_6 = arith.constant 0 : index
    %5 = vector.load %arg4[%c0_5, %c0_6] : memref<8x12xf32, #tpu.memory_space<vmem>>, vector<8x12xf32>
    %6 = vector.extract_strided_slice %4 {offsets = [0, 0], sizes = [4, 132], strides = [1, 1]} : vector<4x136xf32> to vector<4x132xf32>
    %7 = vector.extract_strided_slice %4 {offsets = [0, 2], sizes = [4, 132], strides = [1, 1]} : vector<4x136xf32> to vector<4x132xf32>
    %8 = vector.extract_strided_slice %4 {offsets = [0, 4], sizes = [4, 132], strides = [1, 1]} : vector<4x136xf32> to vector<4x132xf32>
    %9 = tpu.concatenate %6, %7, %8 in 0 : vector<4x132xf32>, vector<4x132xf32>, vector<4x132xf32> -> vector<12x132xf32>
    %cst = arith.constant dense<0.000000e+00> : vector<8x132xf32>
    %10 = tpu.matmul %5, %9, %cst {dimension_numbers = #tpu.dot_dimension_numbers<[1], [0], [0], [1], [0, 0, 1, 1], [], []>} : vector<8x12xf32>, vector<12x132xf32>, vector<8x132xf32> -> vector<8x132xf32>
    %c0_7 = arith.constant 0 : index
    %c0_8 = arith.constant 0 : index
    %11 = vector.load %arg5[%c0_7, %c0_8] : memref<8x1xf32, #tpu.memory_space<vmem>>, vector<8x1xf32>
    %12 = vector.broadcast %11 : vector<8x1xf32> to vector<8x132xf32>
    %13 = arith.addf %10, %12 : vector<8x132xf32>
    %cst_9 = arith.constant 0.000000e+00 : f32
    %14 = vector.broadcast %cst_9 : f32 to vector<8x132xf32>
    %15 = arith.cmpf oge, %13, %14 : vector<8x132xf32>
    %cst_10 = arith.constant 0.00999999977 : f32
    %16 = vector.broadcast %cst_10 : f32 to vector<8x132xf32>
    %17 = arith.mulf %16, %13 : vector<8x132xf32>
    %18 = arith.select %15, %13, %17 : vector<8x132xi1>, vector<8x132xf32>
    %19 = tpu.iota {dimensions = array<i32: 1>} : vector<1x132xi32>
    %c128_i32 = arith.constant 128 : i32
    %20 = arith.muli %arg1, %c128_i32 : i32
    %c2_i32 = arith.constant 2 : i32
    %21 = arith.subi %20, %c2_i32 : i32
    %22 = vector.broadcast %21 : i32 to vector<1x132xi32>
    %23 = arith.addi %19, %22 : vector<1x132xi32>
    %c0_i32 = arith.constant 0 : i32
    %24 = vector.broadcast %c0_i32 : i32 to vector<1x132xi32>
    %25 = arith.cmpi sge, %23, %24 : vector<1x132xi32>
    %c16_i32 = arith.constant 16 : i32
    %26 = vector.broadcast %c16_i32 : i32 to vector<1x132xi32>
    %27 = arith.cmpi slt, %23, %26 : vector<1x132xi32>
    %28 = arith.andi %25, %27 : vector<1x132xi1>
    %cst_11 = arith.constant 0.000000e+00 : f32
    %29 = vector.shape_cast %28 : vector<1x132xi1> to vector<1x132xi1>
    %30 = vector.broadcast %29 : vector<1x132xi1> to vector<8x132xi1>
    %31 = vector.broadcast %cst_11 : f32 to vector<8x132xf32>
    %32 = arith.select %30, %18, %31 : vector<8x132xi1>, vector<8x132xf32>
    %c0_12 = arith.constant 0 : index
    %c0_13 = arith.constant 0 : index
    %33 = vector.load %arg6[%c0_12, %c0_13] : memref<8x24xf32, #tpu.memory_space<vmem>>, vector<8x24xf32>
    %34 = vector.extract_strided_slice %32 {offsets = [0, 0], sizes = [8, 128], strides = [1, 1]} : vector<8x132xf32> to vector<8x128xf32>
    %35 = vector.extract_strided_slice %32 {offsets = [0, 2], sizes = [8, 128], strides = [1, 1]} : vector<8x132xf32> to vector<8x128xf32>
    %36 = vector.extract_strided_slice %32 {offsets = [0, 4], sizes = [8, 128], strides = [1, 1]} : vector<8x132xf32> to vector<8x128xf32>
    %37 = tpu.concatenate %34, %35, %36 in 0 : vector<8x128xf32>, vector<8x128xf32>, vector<8x128xf32> -> vector<24x128xf32>
    %cst_14 = arith.constant dense<0.000000e+00> : vector<8x128xf32>
    %38 = tpu.matmul %33, %37, %cst_14 {dimension_numbers = #tpu.dot_dimension_numbers<[1], [0], [0], [1], [0, 0, 1, 1], [], []>} : vector<8x24xf32>, vector<24x128xf32>, vector<8x128xf32> -> vector<8x128xf32>
    %c0_15 = arith.constant 0 : index
    %c0_16 = arith.constant 0 : index
    %39 = vector.load %arg7[%c0_15, %c0_16] : memref<8x1xf32, #tpu.memory_space<vmem>>, vector<8x1xf32>
    %40 = vector.broadcast %39 : vector<8x1xf32> to vector<8x128xf32>
    %41 = arith.addf %38, %40 : vector<8x128xf32>
    %cst_17 = arith.constant 0.000000e+00 : f32
    %42 = vector.broadcast %cst_17 : f32 to vector<8x128xf32>
    %43 = arith.cmpf oge, %41, %42 : vector<8x128xf32>
    %cst_18 = arith.constant 0.00999999977 : f32
    %44 = vector.broadcast %cst_18 : f32 to vector<8x128xf32>
    %45 = arith.mulf %44, %41 : vector<8x128xf32>
    %46 = arith.select %43, %41, %45 : vector<8x128xi1>, vector<8x128xf32>
    %47 = vector.extract_strided_slice %4 {offsets = [0, 4], sizes = [4, 128], strides = [1, 1]} : vector<4x136xf32> to vector<4x128xf32>
    %c0_19 = arith.constant 0 : index
    %c0_20 = arith.constant 0 : index
    %48 = vector.load %arg8[%c0_19, %c0_20] : memref<8x4xf32, #tpu.memory_space<vmem>>, vector<8x4xf32>
    %cst_21 = arith.constant dense<0.000000e+00> : vector<8x128xf32>
    %49 = tpu.matmul %48, %47, %cst_21 {dimension_numbers = #tpu.dot_dimension_numbers<[1], [0], [0], [1], [0, 0, 1, 1], [], []>} : vector<8x4xf32>, vector<4x128xf32>, vector<8x128xf32> -> vector<8x128xf32>
    %c0_22 = arith.constant 0 : index
    %c0_23 = arith.constant 0 : index
    %50 = vector.load %arg9[%c0_22, %c0_23] : memref<8x1xf32, #tpu.memory_space<vmem>>, vector<8x1xf32>
    %51 = vector.broadcast %50 : vector<8x1xf32> to vector<8x128xf32>
    %52 = arith.addf %49, %51 : vector<8x128xf32>
    %53 = arith.addf %46, %52 : vector<8x128xf32>
    %c0_24 = arith.constant 0 : index
    %54 = memref.load %arg10[%c0_24] : memref<1xf32, #tpu.memory_space<smem>>
    %cst_25 = arith.constant 0.000000e+00 : f32
    %55 = vector.broadcast %cst_25 : f32 to vector<8x128xf32>
    %56 = arith.cmpf oge, %53, %55 : vector<8x128xf32>
    %57 = vector.broadcast %54 : f32 to vector<8x128xf32>
    %58 = arith.mulf %57, %53 : vector<8x128xf32>
    %59 = arith.select %56, %53, %58 : vector<8x128xi1>, vector<8x128xf32>
    %c0_26 = arith.constant 0 : index
    %c0_27 = arith.constant 0 : index
    %c0_28 = arith.constant 0 : index
    %60 = vector.load %arg11[%c0_26, %c0_27, %c0_28] : memref<1x8x128xf32, #tpu.memory_space<vmem>>, vector<1x8x128xf32>
    %61 = vector.shape_cast %60 : vector<1x8x128xf32> to vector<8x128xf32>
    %62 = vector.shape_cast %59 : vector<8x128xf32> to vector<1x8x128xf32>
    tpu.vector_store %arg11[%c0_26, %c0_27, %c0_28], %62 {strides = array<i32>} : memref<1x8x128xf32, #tpu.memory_space<vmem>>, vector<1x8x128xf32>,
    return
  }
  func.func @transform_0(%arg0: i32, %arg1: i32) -> (i32, i32, i32) {
    %c0_i32 = arith.constant 0 : i32
    %c0_i32_0 = arith.constant 0 : i32
    return %arg0, %c0_i32, %arg1 : i32, i32, i32
  }
  func.func @transform_1(%arg0: i32, %arg1: i32) -> (i32, i32, i32) {
    %c1_i32 = arith.constant 1 : i32
    %0 = arith.addi %arg1, %c1_i32 : i32
    %c1_i32_0 = arith.constant 1 : i32
    %1 = arith.muli %0, %c1_i32_0 : i32
    %c0_i32 = arith.constant 0 : i32
    %c0_i32_1 = arith.constant 0 : i32
    return %arg0, %c0_i32, %1 : i32, i32, i32
  }
  func.func @transform_2(%arg0: i32, %arg1: i32) -> (i32, i32) {
    %c0_i32 = arith.constant 0 : i32
    %c0_i32_0 = arith.constant 0 : i32
    %c0_i32_1 = arith.constant 0 : i32
    return %c0_i32, %c0_i32_0 : i32, i32
  }
  func.func @transform_3(%arg0: i32, %arg1: i32) -> (i32, i32) {
    %c0_i32 = arith.constant 0 : i32
    %c0_i32_0 = arith.constant 0 : i32
    %c0_i32_1 = arith.constant 0 : i32
    return %c0_i32, %c0_i32_0 : i32, i32
  }
  func.func @transform_4(%arg0: i32, %arg1: i32) -> (i32, i32) {
    %c0_i32 = arith.constant 0 : i32
    %c0_i32_0 = arith.constant 0 : i32
    %c0_i32_1 = arith.constant 0 : i32
    return %c0_i32, %c0_i32_0 : i32, i32
  }
  func.func @transform_5(%arg0: i32, %arg1: i32) -> (i32, i32) {
    %c0_i32 = arith.constant 0 : i32
    %c0_i32_0 = arith.constant 0 : i32
    %c0_i32_1 = arith.constant 0 : i32
    return %c0_i32, %c0_i32_0 : i32, i32
  }
  func.func @transform_6(%arg0: i32, %arg1: i32) -> (i32, i32) {
    %c0_i32 = arith.constant 0 : i32
    %c0_i32_0 = arith.constant 0 : i32
    %c0_i32_1 = arith.constant 0 : i32
    return %c0_i32, %c0_i32_0 : i32, i32
  }
  func.func @transform_7(%arg0: i32, %arg1: i32) -> (i32, i32) {
    %c0_i32 = arith.constant 0 : i32
    %c0_i32_0 = arith.constant 0 : i32
    %c0_i32_1 = arith.constant 0 : i32
    return %c0_i32, %c0_i32_0 : i32, i32
  }
  func.func @transform_8(%arg0: i32, %arg1: i32) -> i32 {
    %c0_i32 = arith.constant 0 : i32
    %c0_i32_0 = arith.constant 0 : i32
    return %c0_i32 : i32
  }
  func.func @transform_9(%arg0: i32, %arg1: i32) -> (i32, i32, i32) {
    %c0_i32 = arith.constant 0 : i32
    %c0_i32_0 = arith.constant 0 : i32
    return %arg0, %c0_i32, %arg1 : i32, i32, i32
  }
}

</mosaic_0001>

<llo_original>
// kernel: tpu_custom_call.1
$region0: #{tpu_custom_call.1}
  #allocation0 [shape = 'u32[]', space=smem, size = 0x4, offset = 0x4, fixed_abs, tag = 'smem constant byte address 0x4 - core index']
  #allocation1 [shape = 'u32[72,128]{1,0:T(1,128)}', space=vmem, size = 0x9000, scoped, tag = 'internal scratch']
  #allocation2 [shape = 'f32[1]{0:T(128)S(6)}', space=smem, size = 0x200, scoped, tag = 'scoped memory for tpu_custom_call.1']
  %s0 = inlined_call_operand.vmem [shape: f32[2,4,256], index: 0, kind: input, shape index: {}]
  %s1 = inlined_call_operand.hbm [shape: f32[2,4,256], index: 1, kind: input, shape index: {}]
  %s2 = inlined_call_operand.vmem [shape: f32[8,12], index: 2, kind: input, shape index: {}]
  %s3 = inlined_call_operand.vmem [shape: f32[8,1], index: 3, kind: input, shape index: {}]
  %s4 = inlined_call_operand.vmem [shape: f32[8,24], index: 4, kind: input, shape index: {}]
  %s5 = inlined_call_operand.vmem [shape: f32[8,1], index: 5, kind: input, shape index: {}]
  %s6 = inlined_call_operand.vmem [shape: f32[8,4], index: 6, kind: input, shape index: {}]
  %s7 = inlined_call_operand.vmem [shape: f32[8,1], index: 7, kind: input, shape index: {}]
  %s8 = inlined_call_operand.<no memory space> [shape: f32[1], index: 8, kind: input, shape index: {}]
  %s9 = inlined_call_operand.hbm [shape: f32[2,8,128], index: 9, kind: output, shape index: {}]
  %s10 = sld [smem:[#allocation0]]
  $region73: #{tpu_custom_call.1} parent=0
    _
  %s12 = ssub.s32 1, %s10
  %s13 = scalar_select 0, %s12, %s10
  %14 = sst [smem:[#allocation2]] %s8
  $region1: #{tpu_custom_call.1} parent=0
    #allocation3 [shape = 'u8[4096]{0}', space=vmem, size = 0x1000, scoped, tag = 'input window, operand 1']
    #allocation4 [shape = 's32[2]{0}', space=sflag, size = 0x8, scoped, tag = 'scoped memory for tpu_custom_call.1']
    #allocation5 [shape = 's32[2]{0}', space=sflag, size = 0x8, scoped, tag = 'scoped memory for tpu_custom_call.1']
    #allocation6 [shape = 'u8[8192]{0}', space=vmem, size = 0x2000, scoped, tag = 'output window, operand 0']
    %15 = vsyncpa [#allocation4], 0
    %s16 = scalar_lea.sflag [#allocation4], 1
    %17 = vsyncpa %s16, 0
    %18 = vsyncpa [#allocation5], 0
    %s19 = scalar_lea.sflag [#allocation5], 1
    %20 = vsyncpa %s19, 0
    loop: start=0, step=1, limit=4
    $region2: #{tpu_custom_call.1} parent=1 // loop_pre_header
      _
    $region3: #{tpu_custom_call.1} parent=1 // loop_header
      %s22 = sphi 0, %s26
      %p23 = scmp.ge.s32.totalorder %s22, 4
      %s29 = sphi 0, %s41
      %s30 = sphi 0, %s37
      %s31 = sphi 0, %s29
      %s32 = sphi 0, %s30
      %s33 = sphi 0, %s31
      %s34 = sphi 0, %s32
      %s46 = sphi 0, %s48
      %s49 = sphi 0, %s46
      %s50 = sphi 0, %s49
      %s66 = sphi 0, %s50
      %s76 = sphi 0, %s78
      %s79 = sphi 0, %s76
      %s80 = sphi 0, %s79
      %s96 = sphi 0, %s80
      %s100 = sphi 0, %s100
      %s102 = sphi 0, %s100
      %s103 = sphi 0, %s102
      %s117 = sphi 0, %s103
      %s121 = sphi 0, %s121
      %s123 = sphi 0, %s121
      %s124 = sphi 0, %s123
      %s138 = sphi 0, %s124
      %s142 = sphi 0, %s142
      %s144 = sphi 0, %s142
      %s145 = sphi 0, %s144
      %s159 = sphi 0, %s145
      %s163 = sphi 0, %s163
      %s165 = sphi 0, %s163
      %s166 = sphi 0, %s165
      %s180 = sphi 0, %s166
      %s184 = sphi 0, %s184
      %s186 = sphi 0, %s184
      %s187 = sphi 0, %s186
      %s201 = sphi 0, %s187
      %s205 = sphi 0, %s205
      %s207 = sphi 0, %s205
      %s208 = sphi 0, %s207
      %s222 = sphi 0, %s208
      %s226 = sphi 0, %s226
      %s228 = sphi 0, %s226
      %s229 = sphi 0, %s228
      %s243 = sphi 0, %s229
      %s251 = sphi 0, %s253
      %s254 = sphi 0, %s251
      %s255 = sphi 0, %s254
      %s271 = sphi 0, %s255
    $region4: #{tpu_custom_call.1} parent=1 // loop_header_branch
      %25 = sbr.rel (%p23) target = $region8
    $region5: #{tpu_custom_call.1} parent=1 // loop_body
      %s27 = ssub.s32 %s22, 1
      %s28 = ssub.s32 %s22, 2
      %s35 = sadd.s32 1, %s30
      %p36 = scmp.ge.s32.totalorder %s35, 1
      %s37 = scalar_select %p36, 0, %s35
      %s38 = sadd.s32 1, %s29
      %s39 = scalar_select %p36, %s38, %s29
      %p40 = scmp.ge.s32.totalorder %s39, 2
      %s41 = scalar_select %p40, 0, %s39
      %s42 = ssub.s32 %s29, %s41
      %s43 = ssub.s32 %s30, %s37
      %s44 = sor.u32 %s42, %s43
      %p45 = scmp.eq.s32.totalorder %s44, 0
      %s47 = sadd.s32 %s46, 1
      %s48 = scalar_select %p45, %s46, %s47
      %p51 = pneg %p45
      %p52 = scmp.eq.s32.totalorder %s22, 1
      %p53 = por %p51, %p52
      %p54 = scmp.ne.s32.totalorder %s46, %s49
      %p55 = scmp.eq.s32.totalorder %s22, 0
      %p56 = por %p54, %p55
      %p57 = scmp.ne.s32.totalorder %s46, %s49
      %p58 = scmp.eq.s32.totalorder %s27, 1
      %p59 = por %p57, %p58
      %p60 = scmp.ne.s32.totalorder %s49, %s50
      %p61 = scmp.eq.s32.totalorder %s27, 0
      %p62 = por %p60, %p61
      %p63 = scmp.ne.s32.totalorder %s49, %s50
      %p64 = scmp.eq.s32.totalorder %s28, 1
      %p65 = por %p63, %p64
      %p67 = scmp.ne.s32.totalorder %s50, %s66
      %p68 = scmp.eq.s32.totalorder %s28, 0
      %p69 = por %p67, %p68
      %s70 = sadd.s32 %s30, 1
      %s71 = sadd.s32 %s37, 1
      %s72 = ssub.s32 %s29, %s41
      %s73 = ssub.s32 %s70, %s71
      %s74 = sor.u32 %s72, %s73
      %p75 = scmp.eq.s32.totalorder %s74, 0
      %s77 = sadd.s32 %s76, 1
      %s78 = scalar_select %p75, %s76, %s77
      %p81 = pneg %p75
      %p82 = scmp.eq.s32.totalorder %s22, 1
      %p83 = por %p81, %p82
      %p84 = scmp.ne.s32.totalorder %s76, %s79
      %p85 = scmp.eq.s32.totalorder %s22, 0
      %p86 = por %p84, %p85
      %p87 = scmp.ne.s32.totalorder %s76, %s79
      %p88 = scmp.eq.s32.totalorder %s27, 1
      %p89 = por %p87, %p88
      %p90 = scmp.ne.s32.totalorder %s79, %s80
      %p91 = scmp.eq.s32.totalorder %s27, 0
      %p92 = por %p90, %p91
      %p93 = scmp.ne.s32.totalorder %s79, %s80
      %p94 = scmp.eq.s32.totalorder %s28, 1
      %p95 = por %p93, %p94
      %p97 = scmp.ne.s32.totalorder %s80, %s96
      %p98 = scmp.eq.s32.totalorder %s28, 0
      %p99 = por %p97, %p98
      %s101 = sadd.s32 %s100, 1
      %p104 = scmp.eq.s32.totalorder %s22, 1
      %p105 = scmp.ne.s32.totalorder %s100, %s102
      %p106 = scmp.eq.s32.totalorder %s22, 0
      %p107 = por %p105, %p106
      %p108 = scmp.ne.s32.totalorder %s100, %s102
      %p109 = scmp.eq.s32.totalorder %s27, 1
      %p110 = por %p108, %p109
      %p111 = scmp.ne.s32.totalorder %s102, %s103
      %p112 = scmp.eq.s32.totalorder %s27, 0
      %p113 = por %p111, %p112
      %p114 = scmp.ne.s32.totalorder %s102, %s103
      %p115 = scmp.eq.s32.totalorder %s28, 1
      %p116 = por %p114, %p115
      %p118 = scmp.ne.s32.totalorder %s103, %s117
      %p119 = scmp.eq.s32.totalorder %s28, 0
      %p120 = por %p118, %p119
      %s122 = sadd.s32 %s121, 1
      %p125 = scmp.eq.s32.totalorder %s22, 1
      %p126 = scmp.ne.s32.totalorder %s121, %s123
      %p127 = scmp.eq.s32.totalorder %s22, 0
      %p128 = por %p126, %p127
      %p129 = scmp.ne.s32.totalorder %s121, %s123
      %p130 = scmp.eq.s32.totalorder %s27, 1
      %p131 = por %p129, %p130
      %p132 = scmp.ne.s32.totalorder %s123, %s124
      %p133 = scmp.eq.s32.totalorder %s27, 0
      %p134 = por %p132, %p133
      %p135 = scmp.ne.s32.totalorder %s123, %s124
      %p136 = scmp.eq.s32.totalorder %s28, 1
      %p137 = por %p135, %p136
      %p139 = scmp.ne.s32.totalorder %s124, %s138
      %p140 = scmp.eq.s32.totalorder %s28, 0
      %p141 = por %p139, %p140
      %s143 = sadd.s32 %s142, 1
      %p146 = scmp.eq.s32.totalorder %s22, 1
      %p147 = scmp.ne.s32.totalorder %s142, %s144
      %p148 = scmp.eq.s32.totalorder %s22, 0
      %p149 = por %p147, %p148
      %p150 = scmp.ne.s32.totalorder %s142, %s144
      %p151 = scmp.eq.s32.totalorder %s27, 1
      %p152 = por %p150, %p151
      %p153 = scmp.ne.s32.totalorder %s144, %s145
      %p154 = scmp.eq.s32.totalorder %s27, 0
      %p155 = por %p153, %p154
      %p156 = scmp.ne.s32.totalorder %s144, %s145
      %p157 = scmp.eq.s32.totalorder %s28, 1
      %p158 = por %p156, %p157
      %p160 = scmp.ne.s32.totalorder %s145, %s159
      %p161 = scmp.eq.s32.totalorder %s28, 0
      %p162 = por %p160, %p161
      %s164 = sadd.s32 %s163, 1
      %p167 = scmp.eq.s32.totalorder %s22, 1
      %p168 = scmp.ne.s32.totalorder %s163, %s165
      %p169 = scmp.eq.s32.totalorder %s22, 0
      %p170 = por %p168, %p169
      %p171 = scmp.ne.s32.totalorder %s163, %s165
      %p172 = scmp.eq.s32.totalorder %s27, 1
      %p173 = por %p171, %p172
      %p174 = scmp.ne.s32.totalorder %s165, %s166
      %p175 = scmp.eq.s32.totalorder %s27, 0
      %p176 = por %p174, %p175
      %p177 = scmp.ne.s32.totalorder %s165, %s166
      %p178 = scmp.eq.s32.totalorder %s28, 1
      %p179 = por %p177, %p178
      %p181 = scmp.ne.s32.totalorder %s166, %s180
      %p182 = scmp.eq.s32.totalorder %s28, 0
      %p183 = por %p181, %p182
      %s185 = sadd.s32 %s184, 1
      %p188 = scmp.eq.s32.totalorder %s22, 1
      %p189 = scmp.ne.s32.totalorder %s184, %s186
      %p190 = scmp.eq.s32.totalorder %s22, 0
      %p191 = por %p189, %p190
      %p192 = scmp.ne.s32.totalorder %s184, %s186
      %p193 = scmp.eq.s32.totalorder %s27, 1
      %p194 = por %p192, %p193
      %p195 = scmp.ne.s32.totalorder %s186, %s187
      %p196 = scmp.eq.s32.totalorder %s27, 0
      %p197 = por %p195, %p196
      %p198 = scmp.ne.s32.totalorder %s186, %s187
      %p199 = scmp.eq.s32.totalorder %s28, 1
      %p200 = por %p198, %p199
      %p202 = scmp.ne.s32.totalorder %s187, %s201
      %p203 = scmp.eq.s32.totalorder %s28, 0
      %p204 = por %p202, %p203
      %s206 = sadd.s32 %s205, 1
      %p209 = scmp.eq.s32.totalorder %s22, 1
      %p210 = scmp.ne.s32.totalorder %s205, %s207
      %p211 = scmp.eq.s32.totalorder %s22, 0
      %p212 = por %p210, %p211
      %p213 = scmp.ne.s32.totalorder %s205, %s207
      %p214 = scmp.eq.s32.totalorder %s27, 1
      %p215 = por %p213, %p214
      %p216 = scmp.ne.s32.totalorder %s207, %s208
      %p217 = scmp.eq.s32.totalorder %s27, 0
      %p218 = por %p216, %p217
      %p219 = scmp.ne.s32.totalorder %s207, %s208
      %p220 = scmp.eq.s32.totalorder %s28, 1
      %p221 = por %p219, %p220
      %p223 = scmp.ne.s32.totalorder %s208, %s222
      %p224 = scmp.eq.s32.totalorder %s28, 0
      %p225 = por %p223, %p224
      %s227 = sadd.s32 %s226, 1
      %p230 = scmp.eq.s32.totalorder %s22, 1
      %p231 = scmp.ne.s32.totalorder %s226, %s228
      %p232 = scmp.eq.s32.totalorder %s22, 0
      %p233 = por %p231, %p232
      %p234 = scmp.ne.s32.totalorder %s226, %s228
      %p235 = scmp.eq.s32.totalorder %s27, 1
      %p236 = por %p234, %p235
      %p237 = scmp.ne.s32.totalorder %s228, %s229
      %p238 = scmp.eq.s32.totalorder %s27, 0
      %p239 = por %p237, %p238
      %p240 = scmp.ne.s32.totalorder %s228, %s229
      %p241 = scmp.eq.s32.totalorder %s28, 1
      %p242 = por %p240, %p241
      %p244 = scmp.ne.s32.totalorder %s229, %s243
      %p245 = scmp.eq.s32.totalorder %s28, 0
      %p246 = por %p244, %p245
      %s247 = ssub.s32 %s29, %s41
      %s248 = ssub.s32 %s30, %s37
      %s249 = sor.u32 %s247, %s248
      %p250 = scmp.eq.s32.totalorder %s249, 0
      %s252 = sadd.s32 %s251, 1
      %s253 = scalar_select %p250, %s251, %s252
      %p256 = pneg %p250
      %p257 = scmp.eq.s32.totalorder %s22, 1
      %p258 = por %p256, %p257
      %p259 = scmp.ne.s32.totalorder %s251, %s254
      %p260 = scmp.eq.s32.totalorder %s22, 0
      %p261 = por %p259, %p260
      %p262 = scmp.ne.s32.totalorder %s251, %s254
      %p263 = scmp.eq.s32.totalorder %s27, 1
      %p264 = por %p262, %p263
      %p265 = scmp.ne.s32.totalorder %s254, %s255
      %p266 = scmp.eq.s32.totalorder %s27, 0
      %p267 = por %p265, %p266
      %p268 = scmp.ne.s32.totalorder %s254, %s255
      %p269 = scmp.eq.s32.totalorder %s28, 1
      %p270 = por %p268, %p269
      %p272 = scmp.ne.s32.totalorder %s255, %s271
      %p273 = scmp.eq.s32.totalorder %s28, 0
      %p274 = por %p272, %p273
      %p275 = scmp.le.s32.totalorder 1, %s22
      %p276 = scmp.lt.s32.totalorder %s22, 3
      %p277 = pnand %p275, %p276
      %p278 = pneg %p277
      // Predicated region
      $region9: #{tpu_custom_call.1} parent=5 // pred_check
        _
      $region10: #{tpu_custom_call.1} parent=5 // pred_check_branch
        %280 = sbr.rel (%p277) target = $region12
      $region11: #{tpu_custom_call.1} parent=5 // pred_region
        %s281 = ssub.s32 %s22, 1
        // Predicated region
        $region13: #{tpu_custom_call.1} parent=11 // pred_check
          %p282 = pneg %p113
        $region14: #{tpu_custom_call.1} parent=11 // pred_check_branch
          %284 = sbr.rel (%p282) target = $region16
        $region15: #{tpu_custom_call.1} parent=11 // pred_region
          _
        $region16: #{tpu_custom_call.1} parent=11 // pred_fallthru
          _
        // Predicated region
        $region17: #{tpu_custom_call.1} parent=11 // pred_check
          %p285 = pneg %p134
        $region18: #{tpu_custom_call.1} parent=11 // pred_check_branch
          %287 = sbr.rel (%p285) target = $region20
        $region19: #{tpu_custom_call.1} parent=11 // pred_region
          _
        $region20: #{tpu_custom_call.1} parent=11 // pred_fallthru
          _
        // Predicated region
        $region21: #{tpu_custom_call.1} parent=11 // pred_check
          %p288 = pneg %p155
        $region22: #{tpu_custom_call.1} parent=11 // pred_check_branch
          %290 = sbr.rel (%p288) target = $region24
        $region23: #{tpu_custom_call.1} parent=11 // pred_region
          _
        $region24: #{tpu_custom_call.1} parent=11 // pred_fallthru
          _
        // Predicated region
        $region25: #{tpu_custom_call.1} parent=11 // pred_check
          %p291 = pneg %p176
        $region26: #{tpu_custom_call.1} parent=11 // pred_check_branch
          %293 = sbr.rel (%p291) target = $region28
        $region27: #{tpu_custom_call.1} parent=11 // pred_region
          _
        $region28: #{tpu_custom_call.1} parent=11 // pred_fallthru
          _
        // Predicated region
        $region29: #{tpu_custom_call.1} parent=11 // pred_check
          %p294 = pneg %p197
        $region30: #{tpu_custom_call.1} parent=11 // pred_check_branch
          %296 = sbr.rel (%p294) target = $region32
        $region31: #{tpu_custom_call.1} parent=11 // pred_region
          _
        $region32: #{tpu_custom_call.1} parent=11 // pred_fallthru
          _
        // Predicated region
        $region33: #{tpu_custom_call.1} parent=11 // pred_check
          %p297 = pneg %p218
        $region34: #{tpu_custom_call.1} parent=11 // pred_check_branch
          %299 = sbr.rel (%p297) target = $region36
        $region35: #{tpu_custom_call.1} parent=11 // pred_region
          _
        $region36: #{tpu_custom_call.1} parent=11 // pred_fallthru
          _
        // Predicated region
        $region37: #{tpu_custom_call.1} parent=11 // pred_check
          %p300 = pneg %p239
        $region38: #{tpu_custom_call.1} parent=11 // pred_check_branch
          %302 = sbr.rel (%p300) target = $region40
        $region39: #{tpu_custom_call.1} parent=11 // pred_region
          _
        $region40: #{tpu_custom_call.1} parent=11 // pred_fallthru
          _
      $region12: #{tpu_custom_call.1} parent=5 // pred_fallthru
        _
      %p303 = scmp.lt.s32.totalorder %s22, 2
      // Predicated region
      $region41: #{tpu_custom_call.1} parent=5 // pred_check
        %p304 = pneg %p303
      $region42: #{tpu_custom_call.1} parent=5 // pred_check_branch
        %306 = sbr.rel (%p304) target = $region44
      $region43: #{tpu_custom_call.1} parent=5 // pred_region
        // Predicated region
        $region45: #{tpu_custom_call.1} parent=43 // pred_check
          %p307 = pneg %p56
        $region46: #{tpu_custom_call.1} parent=43 // pred_check_branch
          %309 = sbr.rel (%p307) target = $region48
        $region47: #{tpu_custom_call.1} parent=43 // pred_region
          %p310 = scmp.lt.s32.totalorder %s29, 1
          %s311 = scalar_select %p310, %s29, 1
          %p312 = scmp.lt.s32.totalorder %s30, 1
          %s313 = scalar_select %p312, %s30, 1
          %s314 = smul.addr %s311, 2
          %s315 = sadd.s32 %s313, %s314
          %s316 = smul.addr %s315, 4
          %s317 = scalar_lea.vmem %s0, %s316
        $region48: #{tpu_custom_call.1} parent=43 // pred_fallthru
          _
        // Predicated region
        $region49: #{tpu_custom_call.1} parent=43 // pred_check
          %p318 = pneg %p86
        $region50: #{tpu_custom_call.1} parent=43 // pred_check_branch
          %320 = sbr.rel (%p318) target = $region52
        $region51: #{tpu_custom_call.1} parent=43 // pred_region
          %s321 = sand.u32 %s76, 1
          %s322 = scalar_lea.sflag [#allocation4], %s321
          %s323 = sand.u32 %s76, 1
          %s324 = smul.addr %s323, 4
          %s325 = scalar_lea.vmem [#allocation3], %s324
          %s326 = sadd.s32 %s30, 1
          %328 = vsyncadd %s322, 0
          %s329 = smul.addr %s29, 2
          %s330 = sadd.s32 %s326, %s329
          %s331 = smul.addr %s330, 4
          %s332 = scalar_lea.hbm %s1, %s331
          %s334 = sshll.u32 %s332, 4
          %s335 = int_to_ptr.hbm [resolvable:$true] %s334
          %s336 = sshll.u32 %s325, 4
          %s337 = int_to_ptr.vmem [resolvable:$true] %s336
          %339 = dma.hbm_to_vmem [thread:$0]  %s335, 64, %s337, %s322
        $region52: #{tpu_custom_call.1} parent=43 // pred_fallthru
          _
      $region44: #{tpu_custom_call.1} parent=5 // pred_fallthru
        _
      %p340 = scmp.le.s32.totalorder 1, %s22
      %p341 = scmp.lt.s32.totalorder %s22, 3
      %p342 = pnand %p340, %p341
      %p343 = pneg %p342
      // Predicated region
      $region53: #{tpu_custom_call.1} parent=5 // pred_check
        _
      $region54: #{tpu_custom_call.1} parent=5 // pred_check_branch
        %345 = sbr.rel (%p342) target = $region56
      $region55: #{tpu_custom_call.1} parent=5 // pred_region
        %s346 = ssub.s32 %s22, 1
        %s347 = sand.u32 %s79, 1
        %s348 = scalar_lea.sflag [#allocation4], %s347
        %s349 = sand.u32 %s79, 1
        %s350 = smul.addr %s349, 4
        %s351 = scalar_lea.vmem [#allocation3], %s350
        // Predicated region
        $region57: #{tpu_custom_call.1} parent=55 // pred_check
          %p352 = pneg %p92
        $region58: #{tpu_custom_call.1} parent=55 // pred_check_branch
          %354 = sbr.rel (%p352) target = $region60
        $region59: #{tpu_custom_call.1} parent=55 // pred_region
          %356 = dma.done %s348, 64
        $region60: #{tpu_custom_call.1} parent=55 // pred_fallthru
          _
        %p357 = scmp.lt.s32.totalorder %s31, 1
        %s358 = scalar_select %p357, %s31, 1
        %p359 = scmp.lt.s32.totalorder %s32, 1
        %s360 = scalar_select %p359, %s32, 1
        %s361 = smul.addr %s358, 2
        %s362 = sadd.s32 %s360, %s361
        %s363 = smul.addr %s362, 4
        %s364 = scalar_lea.vmem %s0, %s363
        %p365 = pneg %p62
        %p366 = pneg %p59
        %s367 = sand.u32 %s79, 1
        %s368 = scalar_lea.sflag [#allocation4], %s367
        %s369 = sand.u32 %s79, 1
        %s370 = smul.addr %s369, 4
        %s371 = scalar_lea.vmem [#allocation3], %s370
        %p372 = pneg %p92
        %p373 = pneg %p89
        %p374 = pneg %p113
        %p375 = pneg %p110
        %p376 = pneg %p134
        %p377 = pneg %p131
        %p378 = pneg %p155
        %p379 = pneg %p152
        %p380 = pneg %p176
        %p381 = pneg %p173
        %p382 = pneg %p197
        %p383 = pneg %p194
        %p384 = pneg %p218
        %p385 = pneg %p215
        %p386 = pneg %p239
        %p387 = pneg %p236
        %p388 = pneg %p267
        %p389 = pneg %p264
        %s390 = sand.u32 %s254, 1
        %s391 = scalar_lea.sflag [#allocation5], %s390
        %s392 = sand.u32 %s254, 1
        %s393 = smul.addr %s392, 8
        %s394 = scalar_lea.vmem [#allocation6], %s393
        %p395 = scmp.lt.s32.totalorder %s31, 1
        %s396 = scalar_select %p395, %s31, 1
        %p397 = scmp.lt.s32.totalorder %s32, 1
        %s398 = scalar_select %p397, %s32, 1
        %s399 = smul.addr %s396, 2
        %s400 = sadd.s32 %s398, %s399
        %s401 = smul.addr %s400, 4
        %s402 = scalar_lea.vmem %s0, %s401
        %s403 = sadd.s32 %s32, 1
        %v404 = vld [vmem:[%s402] sm:$0xf]
        %v405 = vld [vmem:[%s351] sm:$0xf]
        %v406 = vld [vmem:[%s2] sm:$0xff]
        %v409 = vrot.slane %v404, 4
        %v410 = vrot.slane %v405, 4
        %411 = vrot.lane.b32.xlu0 %v409, 126
        %v412 = vpop.permute.xlu0 %411
        %413 = vrot.lane.b32.xlu0 %v410, 126
        %v414 = vpop.permute.xlu0 %413
        %vm415 = vcmask 1031168
        %v416 = vsel %vm415, %v412, %v414
        %419 = vrot.lane.b32.xlu0 %v404, 124
        %v420 = vpop.permute.xlu0 %419
        %421 = vrot.lane.b32.xlu0 %v405, 124
        %v422 = vpop.permute.xlu0 %421
        %vm423 = vcmask 1014784
        %v424 = vsel %vm423, %v420, %v422
        %vm425 = vcmask 1043456
        %v426 = vsel %vm425, %v404, %v416
        %v427 = vsel %vm425, %v405, %v414
        %v428 = vld [vmem:[%s3] sm:$0xff]
        %430 = vset.pattern.permute.xlu0 0
        %431 = vperm.xlu0 %430, %v428
        %v432 = vpop.permute.xlu0 %431
        %vm434 = vcmask 97280
        %v436 = vsel %vm434, %v406, 0
        %v438 = vsel %vm425, %v424, 0
        %v440 = vsel %vm425, %v422, 0
        %442 = vmatpush.msra.mxu0 0.0
        %443 = vmatpush.msra.mxu0 0.0
        %444 = vmatpush.msra.mxu0 0.0
        %445 = vmatpush.msra.mxu0 0.0
        %446 = vmatpush.msra.mxu0 0.0
        %447 = vmatpush.msra.mxu0 0.0
        %448 = vmatpush.msra.mxu0 0.0
        %449 = vmatpush.msra.mxu0 0.0
        %450 = vmatpush.msra.mxu0 0.0
        %451 = vmatpush.msra.mxu0 0.0
        %452 = vmatpush.msra.mxu0 0.0
        %453 = vmatpush.msra.mxu0 0.0
        %454 = vmatpush.msra.mxu0 0.0
        %455 = vmatpush.msra.mxu0 0.0
        %456 = vmatpush.msra.mxu0 %v438
        %457 = vmatpush.msra.mxu0 %v426
        %458 = vmatmul.f32.gmra.mxu0 %v436
        %v459 = vpop.f32.mrf.mxu0
        %v460 = vadd.f32 %v432, %v459
        %461 = vdwg.mxu0
        %462 = vmatpush.msra.mxu0 0.0
        %463 = vmatpush.msra.mxu0 0.0
        %464 = vmatpush.msra.mxu0 0.0
        %465 = vmatpush.msra.mxu0 0.0
        %466 = vmatpush.msra.mxu0 0.0
        %467 = vmatpush.msra.mxu0 0.0
        %468 = vmatpush.msra.mxu0 0.0
        %469 = vmatpush.msra.mxu0 0.0
        %470 = vmatpush.msra.mxu0 0.0
        %471 = vmatpush.msra.mxu0 0.0
        %472 = vmatpush.msra.mxu0 0.0
        %473 = vmatpush.msra.mxu0 0.0
        %474 = vmatpush.msra.mxu0 0.0
        %475 = vmatpush.msra.mxu0 0.0
        %476 = vmatpush.msra.mxu0 %v440
        %477 = vmatpush.msra.mxu0 %v427
        %478 = vmatmul.f32.gmra.mxu0 %v436
        %v479 = vpop.f32.mrf.mxu0
        %v480 = vadd.f32 %v432, %v479
        %481 = vdwg.mxu0
        %vm482 = vcmp.ge.f32.partialorder %v460, 0.0
        %vm483 = vcmp.ge.f32.partialorder %v480, 0.0
        %v484 = vmul.f32 %v460, 0.01
        %v485 = vmul.f32 %v480, 0.01
        %v486 = vsel %vm482, %v460, %v484
        %v487 = vsel %vm483, %v480, %v485
        %v488 = vlaneseq
        %v489 = vand.u32 %v488, 127
        %v490 = vadd.s32 %v489, 128
        %s491 = smul.u32 %s32, 128
        %s492 = ssub.s32 %s491, 2
        %v493 = vstv %s492
        %v494 = vadd.s32 %v489, %v493
        %v495 = vadd.s32 %v490, %v493
        %vm496 = vcmp.ge.s32.totalorder %v494, 0
        %vm497 = vcmp.ge.s32.totalorder %v495, 0
        %vm498 = vcmp.lt.s32.totalorder %v494, 16
        %vm499 = vcmp.lt.s32.totalorder %v495, 16
        %vm500 = vmand %vm496, %vm498
        %vm501 = vmand %vm497, %vm499
        %v502 = vsel %vm500, 1, 0
        %v503 = vsel %vm501, 1, 0
        %vm504 = vcmp.eq.s32.totalorder %v502, 1
        %vm505 = vcmp.eq.s32.totalorder %v503, 1
        %v506 = vsel %vm504, %v486, 0.0
        %v507 = vsel %vm505, %v487, 0.0
        %v508 = vld [vmem:[%s4] sm:$0xff]
        %511 = vrot.lane.b32.xlu0 %v506, 126
        %v512 = vpop.permute.xlu0 %511
        %513 = vrot.lane.b32.xlu0 %v507, 126
        %v514 = vpop.permute.xlu0 %513
        %v515 = vsel %vm415, %v512, %v514
        %517 = vrot.lane.b32.xlu0 %v506, 124
        %v518 = vpop.permute.xlu0 %517
        %519 = vrot.lane.b32.xlu0 %v507, 124
        %v520 = vpop.permute.xlu0 %519
        %v521 = vsel %vm423, %v518, %v520
        %v523 = vld [vmem:[%s5] sm:$0xff]
        %525 = vset.pattern.permute.xlu0 0
        %526 = vperm.xlu0 %525, %v523
        %v527 = vpop.permute.xlu0 %526
        %vm529 = vcmask 195584
        %v531 = vsel %vm529, %v508, 0
        %533 = vmatpush.msra.mxu0 0.0
        %534 = vmatpush.msra.mxu0 0.0
        %535 = vmatpush.msra.mxu0 0.0
        %536 = vmatpush.msra.mxu0 0.0
        %537 = vmatpush.msra.mxu0 0.0
        %538 = vmatpush.msra.mxu0 0.0
        %539 = vmatpush.msra.mxu0 0.0
        %540 = vmatpush.msra.mxu0 0.0
        %541 = vmatpush.msra.mxu0 0.0
        %542 = vmatpush.msra.mxu0 0.0
        %543 = vmatpush.msra.mxu0 0.0
        %544 = vmatpush.msra.mxu0 0.0
        %545 = vmatpush.msra.mxu0 0.0
        %546 = vmatpush.msra.mxu0 %v521
        %547 = vmatpush.msra.mxu0 %v515
        %548 = vmatpush.msra.mxu0 %v506
        %549 = vmatmul.f32.gmra.mxu0 %v531
        %v550 = vpop.f32.mrf.mxu0
        %v551 = vadd.f32 %v527, %v550
        %552 = vdwg.mxu0
        %vm553 = vcmp.ge.f32.partialorder %v551, 0.0
        %v554 = vmul.f32 %v551, 0.01
        %v555 = vsel %vm553, %v551, %v554
        %v556 = vld [vmem:[%s6] sm:$0xff]
        %v557 = vld [vmem:[%s7] sm:$0xff]
        %559 = vset.pattern.permute.xlu0 0
        %560 = vperm.xlu0 %559, %v557
        %v561 = vpop.permute.xlu0 %560
        %vm563 = vcmask 31744
        %v565 = vsel %vm563, %v556, 0
        %567 = vmatpush.msra.mxu0 0.0
        %568 = vmatpush.msra.mxu0 0.0
        %569 = vmatpush.msra.mxu0 0.0
        %570 = vmatpush.msra.mxu0 0.0
        %571 = vmatpush.msra.mxu0 0.0
        %572 = vmatpush.msra.mxu0 0.0
        %573 = vmatpush.msra.mxu0 0.0
        %574 = vmatpush.msra.mxu0 0.0
        %575 = vmatpush.msra.mxu0 0.0
        %576 = vmatpush.msra.mxu0 0.0
        %577 = vmatpush.msra.mxu0 0.0
        %578 = vmatpush.msra.mxu0 0.0
        %579 = vmatpush.msra.mxu0 0.0
        %580 = vmatpush.msra.mxu0 0.0
        %581 = vmatpush.msra.mxu0 0.0
        %582 = vmatpush.msra.mxu0 %v438
        %583 = vmatmul.f32.gmra.mxu0 %v565
        %v584 = vpop.f32.mrf.mxu0
        %v585 = vadd.f32 %v561, %v584
        %586 = vdwg.mxu0
        %v587 = vadd.f32 %v555, %v585
        %s588 = sld [smem:[#allocation2]]
        %vm589 = vcmp.ge.f32.partialorder %v587, 0.0
        %v590 = vstv %s588
        %v591 = vmul.f32 %v590, %v587
        %v592 = vsel %vm589, %v587, %v591
        %593 = vst [vmem:[%s394] sm:$0xff] %v592
        %s594 = sand.u32 %s254, 1
        %s595 = scalar_lea.sflag [#allocation5], %s594
        %s596 = sand.u32 %s254, 1
        %s597 = smul.addr %s596, 8
        %s598 = scalar_lea.vmem [#allocation6], %s597
        // Predicated region
        $region61: #{tpu_custom_call.1} parent=55 // pred_check
          %p599 = pneg %p264
        $region62: #{tpu_custom_call.1} parent=55 // pred_check_branch
          %601 = sbr.rel (%p599) target = $region64
        $region63: #{tpu_custom_call.1} parent=55 // pred_region
          %603 = vsyncadd %s595, 0
          %s604 = sadd.s32 %s32, %s31
          %s605 = smul.addr %s604, 8
          %s606 = scalar_lea.hbm %s9, %s605
          %s608 = sshll.u32 %s598, 4
          %s609 = int_to_ptr.vmem [resolvable:$true] %s608
          %s610 = sshll.u32 %s606, 4
          %s611 = int_to_ptr.hbm [resolvable:$true] %s610
          %613 = dma.vmem_to_hbm [thread:$0]  %s609, 128, %s611, %s595
        $region64: #{tpu_custom_call.1} parent=55 // pred_fallthru
          _
      $region56: #{tpu_custom_call.1} parent=5 // pred_fallthru
        _
      %p614 = scmp.le.s32.totalorder 2, %s22
      // Predicated region
      $region65: #{tpu_custom_call.1} parent=5 // pred_check
        %p615 = pneg %p614
      $region66: #{tpu_custom_call.1} parent=5 // pred_check_branch
        %617 = sbr.rel (%p615) target = $region68
      $region67: #{tpu_custom_call.1} parent=5 // pred_region
        %s618 = ssub.s32 %s22, 2
        // Predicated region
        $region69: #{tpu_custom_call.1} parent=67 // pred_check
          %p619 = pneg %p270
        $region70: #{tpu_custom_call.1} parent=67 // pred_check_branch
          %621 = sbr.rel (%p619) target = $region72
        $region71: #{tpu_custom_call.1} parent=67 // pred_region
          %s622 = sand.u32 %s255, 1
          %s623 = scalar_lea.sflag [#allocation5], %s622
          %s624 = sand.u32 %s255, 1
          %s625 = smul.addr %s624, 8
          %s626 = scalar_lea.vmem [#allocation6], %s625
          %628 = dma.done %s623, 128
        $region72: #{tpu_custom_call.1} parent=67 // pred_fallthru
          _
      $region68: #{tpu_custom_call.1} parent=5 // pred_fallthru
        _
    $region6: #{tpu_custom_call.1} parent=1 // loop_footer
      %s26 = sadd.s32 1, %s22
    $region7: #{tpu_custom_call.1} parent=1 // loop_footer_branch
      %21 = sbr.rel target = $region3
    $region8: #{tpu_custom_call.1} parent=1 // loop_exit
      _
    %629 = vsyncpa [#allocation4], 1
    %s630 = scalar_lea.sflag [#allocation4], 1
    %631 = vsyncpa %s630, 1
    %632 = vsyncpa [#allocation5], 1
    %s633 = scalar_lea.sflag [#allocation5], 1
    %634 = vsyncpa %s633, 1

</llo_original>
